<compile_context>
chip_gen: v5e
topology: v5e:2x2
jax: 0.10.0
libtpu: 0.0.40
codegen_flags: <defaults>
</compile_context>

<pallas_src>
import jax
import jax.numpy as jnp
from jax.experimental import pallas as pl
from jax.experimental.pallas import tpu as pltpu


def _identity_copy_kernel(yt_ref, out_ref):
    # Pass-through: copy the current VMEM tile of yt into the output tile.
    out_ref[...] = yt_ref[...]


def _choose_2d_view(n_elems: int):
    """Pick (rows, cols) with cols a large multiple of 128 that divides n_elems.

    Falls back to a single wide row (full-extent block / masked stores) when
    n_elems is not divisible by 128.
    """
    lane_cap = 4096  # keep a column block small (<= 16 KiB f32) and lane-dense
    start = min(lane_cap, n_elems)
    start -= start % 128
    for c in range(start, 0, -128):
        if n_elems % c == 0:
            return n_elems // c, c
    return 1, n_elems


def base_constructor_forward(x: jax.Array, yt: jax.Array, t: int) -> jax.Array:
    """Pallas implementation of BaseConstructor.forward: returns yt unchanged."""
    del x, t  # forward ignores x and t

    orig_shape = yt.shape
    dtype = yt.dtype
    itemsize = dtype.itemsize
    n = 1
    for d in orig_shape:
        n *= d

    rows, cols = _choose_2d_view(n)
    yt2d = yt.reshape(rows, cols)

    # Sublane packing granularity: 8 rows for 32-bit, 16 for bf16, 32 for int8.
    sub = max(8, 32 // max(1, itemsize))

    # ~2 MiB per block: in+out double-buffered = 4 live buffers = ~8 MiB VMEM,
    # safe on v5e (16 MiB scoped default), v6e (32 MiB) and v7x (32/64 MiB).
    target_block_bytes = 2 * 1024 * 1024

    # Lane tiling (only matters for the rows == 1 fallback where cols is huge).
    if cols >= 128:
        tile_cols = min(cols, max(128, (target_block_bytes // itemsize) // 128 * 128))
    else:
        tile_cols = cols  # tiny array: single full-extent block

    # Row tiling sized by bytes, rounded to the sublane-packing multiple.
    row_block_bytes = tile_cols * itemsize
    tile_rows = min(rows, max(sub, (target_block_bytes // row_block_bytes) // sub * sub))

    # Prefer >= 2 grid steps so "parallel" can shard the copy across v7x's
    # two TensorCores instead of serializing on one.
    if tile_rows == rows and rows >= 2 * sub and tile_cols == cols:
        tile_rows = max(sub, (rows // 2) // sub * sub)

    grid = (pl.cdiv(rows, tile_rows), pl.cdiv(cols, tile_cols))

    out2d = pl.pallas_call(
        _identity_copy_kernel,
        out_shape=jax.ShapeDtypeStruct((rows, cols), dtype),
        grid=grid,
        in_specs=[pl.BlockSpec((tile_rows, tile_cols), lambda i, j: (i, j))],
        out_specs=pl.BlockSpec((tile_rows, tile_cols), lambda i, j: (i, j)),
        # Output aliases the (reshaped) input buffer: no second HBM allocation.
        input_output_aliases={0: 0},
        compiler_params=pltpu.CompilerParams(
            dimension_semantics=("parallel", "parallel"),
        ),
    )(yt2d)

    return out2d.reshape(orig_shape)


if __name__ == "__main__":
    key = jax.random.PRNGKey(0)
    kx, ky = jax.random.split(key)

    # Small shapes consistent with an image-diffusion forward: NCHW.
    x = jax.random.normal(kx, (2, 4, 16, 16), dtype=jnp.float32)
    yt = jax.random.normal(ky, (2, 4, 16, 16), dtype=jnp.float32)
    t = 5

    # Host-side reference copy (robust even if XLA aliases/donates yt's buffer).
    yt_expected = jnp.asarray(jax.device_get(yt))

    out = base_constructor_forward(x, yt, t)
    out = jax.block_until_ready(out)

    assert out.shape == yt_expected.shape and out.dtype == yt_expected.dtype
    assert bool(jnp.array_equal(out, yt_expected))
    print("KERNEL_OK")
</pallas_src>

<mosaic_0001>
module attributes {stable_mosaic.version = 11 : i64} {
  func.func @_identity_copy_kernel(%arg0: i32, %arg1: i32, %arg2: memref<1x2048xf32, #tpu.memory_space<vmem>>, %arg3: memref<1x2048xf32, #tpu.memory_space<vmem>>) attributes {dimension_semantics = [#tpu.dimension_semantics<parallel>, #tpu.dimension_semantics<parallel>], iteration_bounds = array<i64: 1, 1>, scalar_prefetch = 0 : i64, scratch_operands = 0 : i64, tpu.core_type = #tpu.core_type<tc>, window_params = [{transform_indices = @transform_0, window_bounds = array<i64: 1, 2048>}, {transform_indices = @transform_1, window_bounds = array<i64: 1, 2048>}]} {
    %c0 = arith.constant 0 : index
    %c0_0 = arith.constant 0 : index
    %0 = vector.load %arg2[%c0, %c0_0] : memref<1x2048xf32, #tpu.memory_space<vmem>>, vector<1x2048xf32>
    %c0_1 = arith.constant 0 : index
    %c0_2 = arith.constant 0 : index
    %1 = vector.load %arg3[%c0_1, %c0_2] : memref<1x2048xf32, #tpu.memory_space<vmem>>, vector<1x2048xf32>
    tpu.vector_store %arg3[%c0_1, %c0_2], %0 {strides = array<i32>} : memref<1x2048xf32, #tpu.memory_space<vmem>>, vector<1x2048xf32>,
    return
  }
  func.func @transform_0(%arg0: i32, %arg1: i32) -> (i32, i32) {
    %c0_i32 = arith.constant 0 : i32
    return %arg0, %arg1 : i32, i32
  }
  func.func @transform_1(%arg0: i32, %arg1: i32) -> (i32, i32) {
    %c0_i32 = arith.constant 0 : i32
    return %arg0, %arg1 : i32, i32
  }
}

</mosaic_0001>

<llo_original>
// kernel: tpu_custom_call.1
$region0: #{tpu_custom_call.1}
  #allocation0 [shape = 'u32[]', space=smem, size = 0x4, offset = 0x4, fixed_abs, tag = 'smem constant byte address 0x4 - core index']
  #allocation1 [shape = 'u32[72,128]{1,0:T(1,128)}', space=vmem, size = 0x9000, scoped, tag = 'internal scratch']
  %s0 = inlined_call_operand.hbm [shape: f32[1,2048], index: 0, kind: input, shape index: {}, may-alias: {0,1}]
  %s1 = inlined_call_operand.hbm [shape: f32[1,2048], index: 1, kind: output, shape index: {}, may-alias: {0,1}]
  %s2 = sld [smem:[#allocation0]]
  $region18: #{tpu_custom_call.1} parent=0
    _
  %s4 = ssub.s32 1, %s2
  %s5 = scalar_select 0, %s4, %s2
  $region1: #{tpu_custom_call.1} parent=0
    #allocation2 [shape = 'u8[8192]{0}', space=vmem, size = 0x2000, scoped, tag = 'input window, operand 0, single buffered']
    #allocation3 [shape = 's32[1]{0}', space=sflag, size = 0x4, scoped, tag = 'scoped memory for tpu_custom_call.1']
    #allocation4 [shape = 's32[1]{0}', space=sflag, size = 0x4, scoped, tag = 'scoped memory for tpu_custom_call.1']
    #allocation5 [shape = 'u8[8192]{0}', space=vmem, size = 0x2000, scoped, tag = 'output window, operand 0, single buffered']
    %6 = vsyncpa [#allocation3], 0
    %7 = vsyncpa [#allocation4], 0
    // Predicated region
    $region2: #{tpu_custom_call.1} parent=1 // pred_check
      _
    $region3: #{tpu_custom_call.1} parent=1 // pred_check_branch
      %9 = sbr.rel (0) target = $region5
    $region4: #{tpu_custom_call.1} parent=1 // pred_region
      %11 = vsyncadd [#allocation3], 0
      %s13 = sshll.u32 %s0, 4
      %s14 = int_to_ptr.hbm [resolvable:$true] %s13
      %s15 = sshll.u32 [#allocation2], 4
      %s16 = int_to_ptr.vmem [resolvable:$true] %s15
      %18 = dma.hbm_to_vmem [thread:$0]  %s14, 256, %s16, [#allocation3]
    $region5: #{tpu_custom_call.1} parent=1 // pred_fallthru
      _
    // Predicated region
    $region6: #{tpu_custom_call.1} parent=1 // pred_check
      _
    $region7: #{tpu_custom_call.1} parent=1 // pred_check_branch
      %20 = sbr.rel (0) target = $region9
    $region8: #{tpu_custom_call.1} parent=1 // pred_region
      %22 = dma.done [#allocation3], 256
    $region9: #{tpu_custom_call.1} parent=1 // pred_fallthru
      _
    %v23 = vld [vmem:[#allocation2] sm:$0xff]
    %v24 = vld [vmem:[#allocation2 + $0x8] sm:$0xff]
    %25 = vst [vmem:[#allocation5] sm:$0xff] %v23
    %26 = vst [vmem:[#allocation5 + $0x8] sm:$0xff] %v24
    // Predicated region
    $region10: #{tpu_custom_call.1} parent=1 // pred_check
      _
    $region11: #{tpu_custom_call.1} parent=1 // pred_check_branch
      %28 = sbr.rel (0) target = $region13
    $region12: #{tpu_custom_call.1} parent=1 // pred_region
      %30 = vsyncadd [#allocation4], 0
      %s32 = sshll.u32 [#allocation5], 4
      %s33 = int_to_ptr.vmem [resolvable:$true] %s32
      %s34 = sshll.u32 %s1, 4
      %s35 = int_to_ptr.hbm [resolvable:$true] %s34
      %37 = dma.vmem_to_hbm [thread:$0]  %s33, 256, %s35, [#allocation4]
    $region13: #{tpu_custom_call.1} parent=1 // pred_fallthru
      _
    // Predicated region
    $region14: #{tpu_custom_call.1} parent=1 // pred_check
      _
    $region15: #{tpu_custom_call.1} parent=1 // pred_check_branch
      %39 = sbr.rel (0) target = $region17
    $region16: #{tpu_custom_call.1} parent=1 // pred_region
      %41 = dma.done [#allocation4], 256
    $region17: #{tpu_custom_call.1} parent=1 // pred_fallthru
      _
    %42 = vsyncpa [#allocation3], 1
    %43 = vsyncpa [#allocation4], 1

</llo_original>
